<compile_context>
chip_gen: v7x
topology: tpu7x:2x2x1
jax: 0.10.0
libtpu: 0.0.40
codegen_flags: <defaults>
</compile_context>

<pallas_src>
import numpy as np
import jax
import jax.numpy as jnp
from jax.experimental import pallas as pl
from jax.experimental.pallas import tpu as pltpu


def _round_up(n, m):
    return ((n + m - 1) // m) * m


# --------------------------------- kernels --------------------------------- #

def _make_max_kernel(T):
    def kernel(*refs):
        x_refs, o_ref = refs[:T], refs[T]
        m = x_refs[0][...]
        for t in range(1, T):
            m = jnp.maximum(m, x_refs[t][...])
        o_ref[...] = m
    return kernel


def _sigmoid(x):
    # sigmoid(x) = 0.5 * (1 + tanh(x/2)): one EUP op (tanh) instead of exp+recip.
    return 0.5 * (jnp.tanh(0.5 * x) + 1.0)


def _make_lstm_kernel(T, Hp, mm_dtype, act_dtype):
    def kernel(*refs):
        x_refs = refs[:T]
        (wihf, whhf, bf, wihb, whhb, bb, waf, wab, batt, o_ref) = refs[T:]
        BN, C = x_refs[0].shape

        # Hoisted input projections: one (T*BN, C) @ (C, 4*Hp) MXU matmul per
        # direction, built straight from the VMEM refs -- no persistent f32
        # copies of the T input tiles are kept live across the recurrences.
        x_all = jnp.concatenate(
            [x_refs[t][...].astype(mm_dtype) for t in range(T)], axis=0)

        def cell(pre, h, c, whh_ref):
            # Only h @ W_hh stays on the sequential dependency chain.
            g = pre + jnp.dot(h.astype(mm_dtype), whh_ref[...],
                              preferred_element_type=jnp.float32)
            # Gate nonlinearities in act_dtype (bf16 halves EUP volume on
            # v6e/v7x; use float32 on v5e).  Cell-state math stays f32.
            # Gates stay padded to Hp lanes so slices are free vreg views; the
            # bf16 activations recover the EUP cost of the dead pad lanes.
            ga = g.astype(act_dtype)
            i = _sigmoid(ga[:, 0 * Hp:1 * Hp]).astype(jnp.float32)
            f = _sigmoid(ga[:, 1 * Hp:2 * Hp]).astype(jnp.float32)
            gg = jnp.tanh(ga[:, 2 * Hp:3 * Hp]).astype(jnp.float32)
            o = _sigmoid(ga[:, 3 * Hp:4 * Hp]).astype(jnp.float32)
            c_new = f * c + i * gg
            h_new = o * jnp.tanh(c_new.astype(act_dtype)).astype(jnp.float32)
            return h_new, c_new

        zero_h = jnp.zeros((BN, Hp), jnp.float32)

        # Backward direction first: project, consume, keep only the (BN, 1)
        # partial attention scores.  xg_b is dead before xg_f is created, so the
        # two (T*BN, 4*Hp) f32 projection temporaries never coexist in VMEM.
        xg_b = jnp.dot(x_all, wihb[...], preferred_element_type=jnp.float32) + bb[...]
        wab_row = wab[...]                                             # (1, Hp)
        h, c = zero_h, zero_h
        s_b = [None] * T
        for t in range(T - 1, -1, -1):
            h, c = cell(xg_b[t * BN:(t + 1) * BN, :], h, c, whhb)
            s_b[t] = jnp.sum(h * wab_row, axis=-1, keepdims=True)      # VPU + XLU

        # Forward direction + online-softmax weighted accumulation of x[:, t, :].
        xg_f = jnp.dot(x_all, wihf[...], preferred_element_type=jnp.float32) + bf[...]
        waf_row = waf[...]                                             # (1, Hp)
        b_att = batt[...]                                              # (1, 1)
        h, c = zero_h, zero_h
        m = jnp.full((BN, 1), -jnp.inf, jnp.float32)
        l = jnp.zeros((BN, 1), jnp.float32)
        acc = jnp.zeros((BN, C), jnp.float32)
        for t in range(T):
            h, c = cell(xg_f[t * BN:(t + 1) * BN, :], h, c, whhf)
            s = jnp.sum(h * waf_row, axis=-1, keepdims=True) + s_b[t] + b_att
            m_new = jnp.maximum(m, s)
            scale = jnp.exp(m - m_new)
            p = jnp.exp(s - m_new)
            l = scale * l + p
            acc = scale * acc + p * x_refs[t][...].astype(jnp.float32)
            m = m_new

        # Exact divide for the final normalization (once per tile, EUP-cheap).
        o_ref[...] = (acc / l).astype(o_ref.dtype)
    return kernel


# ------------------------------ module wrapper ------------------------------ #

class JumpingKnowledgePallas:
    """Pallas-TPU version of torch_geometric JumpingKnowledge ('cat'|'max'|'lstm')."""

    def __init__(self, mode, channels=None, num_layers=None, key=None,
                 block_n=256, block_rows=4096,
                 matmul_dtype=jnp.bfloat16, act_dtype=jnp.bfloat16):
        # block_n:     LSTM row tile (128-256 recommended on all gens; mult of 8).
        # block_rows:  'max' row tile over the lane-dense (N*C/128, 128) view
        #              (4096 x 128 x f32 = 2 MiB per input per buffer).
        # matmul_dtype: MXU operand dtype (bf16 on v5e/v6e/v7x; float32 escape
        #              hatch for accuracy-sensitive users).
        # act_dtype:   dtype for gate nonlinearities; bf16 halves EUP work on
        #              v6e/v7x, pass jnp.float32 on v5e (no bf16 VPU/EUP).
        self.mode = mode.lower()
        assert self.mode in ('cat', 'max', 'lstm')
        assert block_n % 8 == 0 and block_rows % 8 == 0
        self.block_n = int(block_n)
        self.block_rows = int(block_rows)
        self.matmul_dtype = matmul_dtype
        self.act_dtype = act_dtype

        if self.mode == 'lstm':
            assert channels is not None and num_layers is not None and key is not None
            C, T = channels, num_layers
            H = num_layers * channels // 2
            Hp = _round_up(H, 128)                 # lane-aligned gate blocks
            self.C, self.T, self.H, self.Hp = C, T, H, Hp

            k = jax.random.split(key, 10)
            u = lambda kk, shape, sc: jax.random.uniform(kk, shape, jnp.float32, -sc, sc)
            s = 1.0 / np.sqrt(H)
            sa = 1.0 / np.sqrt(2 * H)
            # Raw PyTorch-layout parameters (used by the pure-JAX reference).
            self.raw = dict(
                wih_f=u(k[0], (4 * H, C), s), whh_f=u(k[1], (4 * H, H), s),
                b_f=u(k[2], (4 * H,), s) + u(k[3], (4 * H,), s),
                wih_b=u(k[4], (4 * H, C), s), whh_b=u(k[5], (4 * H, H), s),
                b_b=u(k[6], (4 * H,), s) + u(k[7], (4 * H,), s),
                w_att=u(k[8], (1, 2 * H), sa), b_att=u(k[9], (1,), sa),
            )

            # Gate-padded, transposed, MXU-ready copies.  Zero pad lanes keep the
            # padded hidden-state lanes exactly zero through the recurrence.
            def pad_ih(w):                         # (4H, C) -> (C, 4*Hp)
                out = jnp.zeros((C, 4 * Hp), jnp.float32)
                for g in range(4):
                    out = out.at[:, g * Hp:g * Hp + H].set(w[g * H:(g + 1) * H, :].T)
                return out.astype(matmul_dtype)

            def pad_hh(w):                         # (4H, H) -> (Hp, 4*Hp)
                out = jnp.zeros((Hp, 4 * Hp), jnp.float32)
                for g in range(4):
                    out = out.at[:H, g * Hp:g * Hp + H].set(w[g * H:(g + 1) * H, :].T)
                return out.astype(matmul_dtype)

            def pad_b(b):                          # (4H,) -> (1, 4*Hp)
                out = jnp.zeros((1, 4 * Hp), jnp.float32)
                for g in range(4):
                    out = out.at[0, g * Hp:g * Hp + H].set(b[g * H:(g + 1) * H])
                return out

            self.wih_f = pad_ih(self.raw['wih_f'])
            self.whh_f = pad_hh(self.raw['whh_f'])
            self.b_f = pad_b(self.raw['b_f'])
            self.wih_b = pad_ih(self.raw['wih_b'])
            self.whh_b = pad_hh(self.raw['whh_b'])
            self.b_b = pad_b(self.raw['b_b'])
            watt = self.raw['w_att']
            self.w_att_f = jnp.zeros((1, Hp), jnp.float32).at[0, :H].set(watt[0, :H])
            self.w_att_b = jnp.zeros((1, Hp), jnp.float32).at[0, :H].set(watt[0, H:])
            self.b_att = self.raw['b_att'].reshape(1, 1)

    # ----------------------------------------------------------------------- #
    def __call__(self, xs):
        assert isinstance(xs, (list, tuple))
        xs = list(xs)
        N, C = xs[0].shape
        dtype = xs[0].dtype

        if self.mode == 'cat':
            # Pure layout op: a Pallas copy kernel would only add HBM traffic.
            return jnp.concatenate(xs, axis=-1)
        if self.mode == 'max':
            return self._max_forward(xs, N, C, dtype)
        return self._lstm_forward(xs, N, C, dtype)

    # -------------------------------- 'max' --------------------------------- #
    def _max_forward(self, xs, N, C, dtype):
        T = len(xs)
        isz = np.dtype(dtype).itemsize

        def vmem_limit(tile_bytes):
            # (T inputs + 1 output) x double buffers + margin; explicit so the
            # budget is not hostage to the 16 MiB (v5e) / 32 MiB defaults.
            return int(min(128 << 20,
                           max(8 << 20, 2 * (T + 1) * tile_bytes + (2 << 20))))

        NC = N * C
        if NC % 128 == 0:
            # Lane-dense path: view every (N, C) input as a contiguous
            # (N*C/128, 128) array (free reinterpretation) so vregs and stores
            # are fully dense; ~1-2 MiB tiles per input per step.
            rows = NC // 128
            br = rows if rows <= self.block_rows else self.block_rows
            xs2 = [x.reshape(rows, 128) for x in xs]
            out = pl.pallas_call(
                _make_max_kernel(T),
                out_shape=jax.ShapeDtypeStruct((rows, 128), dtype),
                grid=(pl.cdiv(rows, br),),
                in_specs=[pl.BlockSpec((br, 128), lambda i: (i, 0))] * T,
                out_specs=pl.BlockSpec((br, 128), lambda i: (i, 0)),
                compiler_params=pltpu.CompilerParams(
                    dimension_semantics=("parallel",),
                    vmem_limit_bytes=vmem_limit(br * 128 * isz)),
            )(*xs2)
            return out.reshape(N, C)

        # Fallback (N*C not 128-divisible): natural (N, C) blocks.  The ragged
        # last row-block is masked by Pallas -- no host-side pad / slice copies.
        bn = N if N <= self.block_n else self.block_n
        return pl.pallas_call(
            _make_max_kernel(T),
            out_shape=jax.ShapeDtypeStruct((N, C), dtype),
            grid=(pl.cdiv(N, bn),),
            in_specs=[pl.BlockSpec((bn, C), lambda i: (i, 0))] * T,
            out_specs=pl.BlockSpec((bn, C), lambda i: (i, 0)),
            compiler_params=pltpu.CompilerParams(
                dimension_semantics=("parallel",),
                vmem_limit_bytes=vmem_limit(bn * C * isz)),
        )(*xs)

    # -------------------------------- 'lstm' -------------------------------- #
    def _lstm_forward(self, xs, N, C, dtype):
        T = len(xs)
        assert T == self.T and C == self.C
        Hp = self.Hp
        in_isz = np.dtype(dtype).itemsize
        mm_isz = np.dtype(self.matmul_dtype).itemsize

        # Row tile; ragged tail handled by Pallas boundary masking (all math is
        # row-local, so garbage tail rows never contaminate valid rows and their
        # stores are dropped).
        BN = N if N <= self.block_n else self.block_n
        grid = (pl.cdiv(N, BN),)

        params = (self.wih_f, self.whh_f, self.b_f,
                  self.wih_b, self.whh_b, self.b_b,
                  self.w_att_f, self.w_att_b, self.b_att)

        def const_spec(a):
            # Constant-index weights/biases are never re-fetched across the grid:
            # single-buffer them (halves their VMEM footprint).
            nd = a.ndim
            return pl.BlockSpec(a.shape, lambda i, _nd=nd: (0,) * _nd,
                                pipeline_mode=pl.Buffered(1))

        # Explicit VMEM budget computed from the actual buffer sizes.
        w_bytes = sum(int(np.prod(p.shape)) * p.dtype.itemsize for p in params)
        est = (2 * T * BN * C * in_isz        # double-buffered input tiles
               + 2 * BN * C * in_isz          # double-buffered output tile
               + w_bytes                      # single-buffered parameters
               + T * BN * C * mm_isz          # x_all
               + T * BN * 4 * Hp * 4          # one hoisted projection at a time
               + 3 * BN * 4 * Hp * 4          # gate pre-activation temporaries
               + 6 * BN * Hp * 4              # h, c, gate slices (f32)
               + 2 * BN * C * 4)              # acc + weighted x tile
        vmem_limit = int(min(128 << 20, max(16 << 20, 2 * est)))

        # Advisory cost estimate so XLA can schedule the surrounding graph.
        cost = pl.CostEstimate(
            flops=int(2 * 2 * T * N * C * 4 * Hp      # two hoisted projections
                      + 2 * 2 * T * N * Hp * 4 * Hp), # 2T recurrent hh matmuls
            transcendentals=int(10 * T * N * Hp + 2 * T * N),
            bytes_accessed=int((T + 1) * N * C * in_isz + w_bytes))

        x_specs = [pl.BlockSpec((BN, C), lambda i: (i, 0)) for _ in range(T)]
        out_spec = pl.BlockSpec((BN, C), lambda i: (i, 0))

        return pl.pallas_call(
            _make_lstm_kernel(T, Hp, self.matmul_dtype, self.act_dtype),
            out_shape=jax.ShapeDtypeStruct((N, C), dtype),
            grid=grid,
            in_specs=x_specs + [const_spec(p) for p in params],
            out_specs=out_spec,
            compiler_params=pltpu.CompilerParams(
                dimension_semantics=("parallel",),
                vmem_limit_bytes=vmem_limit),
            cost_estimate=cost,
        )(*xs, *params)


# ----------------------------- pure-JAX reference --------------------------- #

def _lstm_reference(xs, raw, H):
    x = jnp.stack(xs, axis=1)                    # (N, T, C)
    N, T, C = x.shape

    def run(wih, whh, b, reverse):
        h = jnp.zeros((N, H)); c = jnp.zeros((N, H)); outs = [None] * T
        order = range(T - 1, -1, -1) if reverse else range(T)
        for t in order:
            g = x[:, t] @ wih.T + h @ whh.T + b
            i = jax.nn.sigmoid(g[:, :H]); f = jax.nn.sigmoid(g[:, H:2 * H])
            gg = jnp.tanh(g[:, 2 * H:3 * H]); o = jax.nn.sigmoid(g[:, 3 * H:])
            c = f * c + i * gg
            h = o * jnp.tanh(c)
            outs[t] = h
        return outs

    hf = run(raw['wih_f'], raw['whh_f'], raw['b_f'], False)
    hb = run(raw['wih_b'], raw['whh_b'], raw['b_b'], True)
    w_att, b_att = raw['w_att'], raw['b_att']
    scores = jnp.stack([hf[t] @ w_att[0, :H] + hb[t] @ w_att[0, H:] + b_att[0]
                        for t in range(T)], axis=1)              # (N, T)
    p = jax.nn.softmax(scores, axis=-1)
    return jnp.sum(x * p[:, :, None], axis=1)


# ----------------------------------- main ----------------------------------- #

if __name__ == "__main__":
    key = jax.random.PRNGKey(0)
    N, C, T = 300, 32, 4                     # N deliberately not a block multiple
    kx, kp = jax.random.split(key)
    xs = [jax.random.normal(k, (N, C), jnp.float32) for k in jax.random.split(kx, T)]

    # mode = 'cat' (pure layout op)
    jk_cat = JumpingKnowledgePallas('cat')
    out_cat = jax.block_until_ready(jk_cat(xs))
    np.testing.assert_allclose(np.asarray(out_cat),
                               np.asarray(jnp.concatenate(xs, axis=-1)))

    # mode = 'max' -- lane-dense path (N*C divisible by 128)
    jk_max = JumpingKnowledgePallas('max')
    out_max = jax.block_until_ready(jk_max(xs))
    ref_max = np.max(np.stack([np.asarray(x) for x in xs], axis=-1), axis=-1)
    np.testing.assert_allclose(np.asarray(out_max), ref_max)

    # mode = 'max' -- fallback (N, C) path with a ragged, Pallas-masked tail
    xs_odd = [x[:297] for x in xs]            # 297*32 is not divisible by 128
    out_max2 = jax.block_until_ready(jk_max(xs_odd))
    ref_max2 = np.max(np.stack([np.asarray(x) for x in xs_odd], axis=-1), axis=-1)
    np.testing.assert_allclose(np.asarray(out_max2), ref_max2)

    # mode = 'lstm' (bf16 MXU operands + bf16 gate nonlinearities, f32 state math
    # and exact final normalization -> loose tolerance vs the f32 reference)
    jk_lstm = JumpingKnowledgePallas('lstm', channels=C, num_layers=T, key=kp)
    out_lstm = jax.block_until_ready(jk_lstm(xs))
    ref_lstm = _lstm_reference(xs, jk_lstm.raw, jk_lstm.H)
    np.testing.assert_allclose(np.asarray(out_lstm), np.asarray(ref_lstm),
                               rtol=5e-2, atol=5e-2)

    print("KERNEL_OK")
</pallas_src>

<mosaic_0001>
module attributes {stable_mosaic.version = 11 : i64} {
  func.func @kernel(%arg0: i32, %arg1: memref<75x128xf32, #tpu.memory_space<vmem>>, %arg2: memref<75x128xf32, #tpu.memory_space<vmem>>, %arg3: memref<75x128xf32, #tpu.memory_space<vmem>>, %arg4: memref<75x128xf32, #tpu.memory_space<vmem>>, %arg5: memref<75x128xf32, #tpu.memory_space<vmem>>) attributes {dimension_semantics = [#tpu.dimension_semantics<parallel>], iteration_bounds = array<i64: 1>, scalar_prefetch = 0 : i64, scratch_operands = 0 : i64, tpu.core_type = #tpu.core_type<tc>, window_params = [{transform_indices = @transform_0, window_bounds = array<i64: 75, 128>}, {transform_indices = @transform_1, window_bounds = array<i64: 75, 128>}, {transform_indices = @transform_2, window_bounds = array<i64: 75, 128>}, {transform_indices = @transform_3, window_bounds = array<i64: 75, 128>}, {transform_indices = @transform_4, window_bounds = array<i64: 75, 128>}]} {
    %c0 = arith.constant 0 : index
    %c0_0 = arith.constant 0 : index
    %0 = vector.load %arg1[%c0, %c0_0] : memref<75x128xf32, #tpu.memory_space<vmem>>, vector<75x128xf32>
    %c0_1 = arith.constant 0 : index
    %c0_2 = arith.constant 0 : index
    %1 = vector.load %arg2[%c0_1, %c0_2] : memref<75x128xf32, #tpu.memory_space<vmem>>, vector<75x128xf32>
    %2 = arith.maximumf %0, %1 : vector<75x128xf32>
    %c0_3 = arith.constant 0 : index
    %c0_4 = arith.constant 0 : index
    %3 = vector.load %arg3[%c0_3, %c0_4] : memref<75x128xf32, #tpu.memory_space<vmem>>, vector<75x128xf32>
    %4 = arith.maximumf %2, %3 : vector<75x128xf32>
    %c0_5 = arith.constant 0 : index
    %c0_6 = arith.constant 0 : index
    %5 = vector.load %arg4[%c0_5, %c0_6] : memref<75x128xf32, #tpu.memory_space<vmem>>, vector<75x128xf32>
    %6 = arith.maximumf %4, %5 : vector<75x128xf32>
    %c0_7 = arith.constant 0 : index
    %c0_8 = arith.constant 0 : index
    %7 = vector.load %arg5[%c0_7, %c0_8] : memref<75x128xf32, #tpu.memory_space<vmem>>, vector<75x128xf32>
    tpu.vector_store %arg5[%c0_7, %c0_8], %6 {strides = array<i32>} : memref<75x128xf32, #tpu.memory_space<vmem>>, vector<75x128xf32>,
    return
  }
  func.func @transform_0(%arg0: i32) -> (i32, i32) {
    %c0_i32 = arith.constant 0 : i32
    %c0_i32_0 = arith.constant 0 : i32
    return %arg0, %c0_i32 : i32, i32
  }
  func.func @transform_1(%arg0: i32) -> (i32, i32) {
    %c0_i32 = arith.constant 0 : i32
    %c0_i32_0 = arith.constant 0 : i32
    return %arg0, %c0_i32 : i32, i32
  }
  func.func @transform_2(%arg0: i32) -> (i32, i32) {
    %c0_i32 = arith.constant 0 : i32
    %c0_i32_0 = arith.constant 0 : i32
    return %arg0, %c0_i32 : i32, i32
  }
  func.func @transform_3(%arg0: i32) -> (i32, i32) {
    %c0_i32 = arith.constant 0 : i32
    %c0_i32_0 = arith.constant 0 : i32
    return %arg0, %c0_i32 : i32, i32
  }
  func.func @transform_4(%arg0: i32) -> (i32, i32) {
    %c0_i32 = arith.constant 0 : i32
    %c0_i32_0 = arith.constant 0 : i32
    return %arg0, %c0_i32 : i32, i32
  }
}

</mosaic_0001>

<llo_original>
// kernel: tpu_custom_call.1
$region0: #{tpu_custom_call.1}
  #allocation0 [shape = 'u32[]', space=smem, size = 0x4, offset = 0x4, fixed_abs, tag = 'smem constant byte address 0x4 - core index']
  #allocation1 [shape = 'u32[144,128]{1,0:T(1,128)}', space=vmem, size = 0x12000, scoped, tag = 'internal scratch']
  %s0 = inlined_call_operand.hbm [shape: f32[75,128], index: 0, kind: input, shape index: {}]
  %s1 = inlined_call_operand.hbm [shape: f32[75,128], index: 1, kind: input, shape index: {}]
  %s2 = inlined_call_operand.hbm [shape: f32[75,128], index: 2, kind: input, shape index: {}]
  %s3 = inlined_call_operand.hbm [shape: f32[75,128], index: 3, kind: input, shape index: {}]
  %s4 = inlined_call_operand.hbm [shape: f32[75,128], index: 4, kind: output, shape index: {}]
  %s5 = sld [smem:[#allocation0]]
  $region42: #{tpu_custom_call.1} parent=0
    _
  %s7 = ssub.s32 1, %s5
  %s8 = scalar_select 0, %s7, %s5
  $region1: #{tpu_custom_call.1} parent=0
    #allocation2 [shape = 'u8[40960]{0}', space=vmem, size = 0xa000, scoped, tag = 'input window, operand 0, single buffered']
    #allocation3 [shape = 's32[1]{0}', space=sflag, size = 0x4, scoped, tag = 'scoped memory for tpu_custom_call.1']
    #allocation4 [shape = 's32[1]{0}', space=sflag, size = 0x4, scoped, tag = 'scoped memory for tpu_custom_call.1']
    #allocation5 [shape = 'u8[40960]{0}', space=vmem, size = 0xa000, scoped, tag = 'input window, operand 1, single buffered']
    #allocation6 [shape = 's32[1]{0}', space=sflag, size = 0x4, scoped, tag = 'scoped memory for tpu_custom_call.1']
    #allocation7 [shape = 'u8[40960]{0}', space=vmem, size = 0xa000, scoped, tag = 'input window, operand 2, single buffered']
    #allocation8 [shape = 'u8[40960]{0}', space=vmem, size = 0xa000, scoped, tag = 'input window, operand 3, single buffered']
    #allocation9 [shape = 's32[1]{0}', space=sflag, size = 0x4, scoped, tag = 'scoped memory for tpu_custom_call.1']
    #allocation10 [shape = 'u8[40960]{0}', space=vmem, size = 0xa000, scoped, tag = 'output window, operand 0, single buffered']
    %9 = vsyncpa [#allocation3], 0
    %10 = vsyncpa [#allocation6], 0
    %11 = vsyncpa [#allocation9], 0
    %12 = vsyncpa [#allocation4], 0
    // Predicated region
    $region2: #{tpu_custom_call.1} parent=1 // pred_check
      _
    $region3: #{tpu_custom_call.1} parent=1 // pred_check_branch
      %14 = sbr.rel (0) target = $region5
    $region4: #{tpu_custom_call.1} parent=1 // pred_region
      %s16 = ssub.s32 1280, 1280
      %17 = vsyncadd [#allocation3], %s16
      %s18 = sshll.u32 [#allocation2], 4
      %s19 = int_to_ptr.vmem [resolvable:$true] %s18
      %24 = dma.hbm_to_vmem [thread:$0]  %s0, 1280, %s19, [#allocation3], 128, 128, 8
    $region5: #{tpu_custom_call.1} parent=1 // pred_fallthru
      _
    // Predicated region
    $region6: #{tpu_custom_call.1} parent=1 // pred_check
      _
    $region7: #{tpu_custom_call.1} parent=1 // pred_check_branch
      %26 = sbr.rel (0) target = $region9
    $region8: #{tpu_custom_call.1} parent=1 // pred_region
      %s28 = ssub.s32 1280, 1280
      %29 = vsyncadd [#allocation6], %s28
      %s30 = sshll.u32 [#allocation5], 4
      %s31 = int_to_ptr.vmem [resolvable:$true] %s30
      %36 = dma.hbm_to_vmem [thread:$0]  %s1, 1280, %s31, [#allocation6], 128, 128, 8
    $region9: #{tpu_custom_call.1} parent=1 // pred_fallthru
      _
    // Predicated region
    $region10: #{tpu_custom_call.1} parent=1 // pred_check
      _
    $region11: #{tpu_custom_call.1} parent=1 // pred_check_branch
      %38 = sbr.rel (0) target = $region13
    $region12: #{tpu_custom_call.1} parent=1 // pred_region
      %s40 = ssub.s32 1280, 1280
      %41 = vsyncadd [#allocation6], %s40
      %s42 = sshll.u32 [#allocation7], 4
      %s43 = int_to_ptr.vmem [resolvable:$true] %s42
      %48 = dma.hbm_to_vmem [thread:$0]  %s2, 1280, %s43, [#allocation6], 128, 128, 8
    $region13: #{tpu_custom_call.1} parent=1 // pred_fallthru
      _
    // Predicated region
    $region14: #{tpu_custom_call.1} parent=1 // pred_check
      _
    $region15: #{tpu_custom_call.1} parent=1 // pred_check_branch
      %50 = sbr.rel (0) target = $region17
    $region16: #{tpu_custom_call.1} parent=1 // pred_region
      %s52 = ssub.s32 1280, 1280
      %53 = vsyncadd [#allocation9], %s52
      %s54 = sshll.u32 [#allocation8], 4
      %s55 = int_to_ptr.vmem [resolvable:$true] %s54
      %60 = dma.hbm_to_vmem [thread:$0]  %s3, 1280, %s55, [#allocation9], 128, 128, 8
    $region17: #{tpu_custom_call.1} parent=1 // pred_fallthru
      _
    // Predicated region
    $region18: #{tpu_custom_call.1} parent=1 // pred_check
      _
    $region19: #{tpu_custom_call.1} parent=1 // pred_check_branch
      %62 = sbr.rel (0) target = $region21
    $region20: #{tpu_custom_call.1} parent=1 // pred_region
      %63 = dma.done [#allocation3], 1280
    $region21: #{tpu_custom_call.1} parent=1 // pred_fallthru
      _
    // Predicated region
    $region22: #{tpu_custom_call.1} parent=1 // pred_check
      _
    $region23: #{tpu_custom_call.1} parent=1 // pred_check_branch
      %65 = sbr.rel (0) target = $region25
    $region24: #{tpu_custom_call.1} parent=1 // pred_region
      %66 = dma.done [#allocation6], 1280
    $region25: #{tpu_custom_call.1} parent=1 // pred_fallthru
      _
    // Predicated region
    $region26: #{tpu_custom_call.1} parent=1 // pred_check
      _
    $region27: #{tpu_custom_call.1} parent=1 // pred_check_branch
      %68 = sbr.rel (0) target = $region29
    $region28: #{tpu_custom_call.1} parent=1 // pred_region
      %69 = dma.done [#allocation6], 1280
    $region29: #{tpu_custom_call.1} parent=1 // pred_fallthru
      _
    // Predicated region
    $region30: #{tpu_custom_call.1} parent=1 // pred_check
      _
    $region31: #{tpu_custom_call.1} parent=1 // pred_check_branch
      %71 = sbr.rel (0) target = $region33
    $region32: #{tpu_custom_call.1} parent=1 // pred_region
      %72 = dma.done [#allocation9], 1280
    $region33: #{tpu_custom_call.1} parent=1 // pred_fallthru
      _
    %v73 = vld [vmem:[#allocation2] sm:$0xff]
    %v74 = vld [vmem:[#allocation2 + $0x8] sm:$0xff]
    %v75 = vld [vmem:[#allocation2 + $0x10] sm:$0xff]
    %v76 = vld [vmem:[#allocation2 + $0x18] sm:$0xff]
    %v77 = vld [vmem:[#allocation2 + $0x20] sm:$0xff]
    %v78 = vld [vmem:[#allocation2 + $0x28] sm:$0xff]
    %v79 = vld [vmem:[#allocation2 + $0x30] sm:$0xff]
    %v80 = vld [vmem:[#allocation2 + $0x38] sm:$0xff]
    %v81 = vld [vmem:[#allocation2 + $0x40] sm:$0xff]
    %v82 = vld [vmem:[#allocation2 + $0x48] sm:$0x7]
    %v83 = vld [vmem:[#allocation5] sm:$0xff]
    %v84 = vld [vmem:[#allocation5 + $0x8] sm:$0xff]
    %v85 = vld [vmem:[#allocation5 + $0x10] sm:$0xff]
    %v86 = vld [vmem:[#allocation5 + $0x18] sm:$0xff]
    %v87 = vld [vmem:[#allocation5 + $0x20] sm:$0xff]
    %v88 = vld [vmem:[#allocation5 + $0x28] sm:$0xff]
    %v89 = vld [vmem:[#allocation5 + $0x30] sm:$0xff]
    %v90 = vld [vmem:[#allocation5 + $0x38] sm:$0xff]
    %v91 = vld [vmem:[#allocation5 + $0x40] sm:$0xff]
    %v92 = vld [vmem:[#allocation5 + $0x48] sm:$0x7]
    %v93 = vmax.f32 %v73, %v83
    %v94 = vmax.f32 %v74, %v84
    %v95 = vmax.f32 %v75, %v85
    %v96 = vmax.f32 %v76, %v86
    %v97 = vmax.f32 %v77, %v87
    %v98 = vmax.f32 %v78, %v88
    %v99 = vmax.f32 %v79, %v89
    %v100 = vmax.f32 %v80, %v90
    %v101 = vmax.f32 %v81, %v91
    %v102 = vmax.f32 %v82, %v92
    %v103 = vld [vmem:[#allocation7] sm:$0xff]
    %v104 = vld [vmem:[#allocation7 + $0x8] sm:$0xff]
    %v105 = vld [vmem:[#allocation7 + $0x10] sm:$0xff]
    %v106 = vld [vmem:[#allocation7 + $0x18] sm:$0xff]
    %v107 = vld [vmem:[#allocation7 + $0x20] sm:$0xff]
    %v108 = vld [vmem:[#allocation7 + $0x28] sm:$0xff]
    %v109 = vld [vmem:[#allocation7 + $0x30] sm:$0xff]
    %v110 = vld [vmem:[#allocation7 + $0x38] sm:$0xff]
    %v111 = vld [vmem:[#allocation7 + $0x40] sm:$0xff]
    %v112 = vld [vmem:[#allocation7 + $0x48] sm:$0x7]
    %v113 = vmax.f32 %v93, %v103
    %v114 = vmax.f32 %v94, %v104
    %v115 = vmax.f32 %v95, %v105
    %v116 = vmax.f32 %v96, %v106
    %v117 = vmax.f32 %v97, %v107
    %v118 = vmax.f32 %v98, %v108
    %v119 = vmax.f32 %v99, %v109
    %v120 = vmax.f32 %v100, %v110
    %v121 = vmax.f32 %v101, %v111
    %v122 = vmax.f32 %v102, %v112
    %v123 = vld [vmem:[#allocation8] sm:$0xff]
    %v124 = vld [vmem:[#allocation8 + $0x8] sm:$0xff]
    %v125 = vld [vmem:[#allocation8 + $0x10] sm:$0xff]
    %v126 = vld [vmem:[#allocation8 + $0x18] sm:$0xff]
    %v127 = vld [vmem:[#allocation8 + $0x20] sm:$0xff]
    %v128 = vld [vmem:[#allocation8 + $0x28] sm:$0xff]
    %v129 = vld [vmem:[#allocation8 + $0x30] sm:$0xff]
    %v130 = vld [vmem:[#allocation8 + $0x38] sm:$0xff]
    %v131 = vld [vmem:[#allocation8 + $0x40] sm:$0xff]
    %v132 = vld [vmem:[#allocation8 + $0x48] sm:$0x7]
    %v133 = vmax.f32 %v113, %v123
    %v134 = vmax.f32 %v114, %v124
    %v135 = vmax.f32 %v115, %v125
    %v136 = vmax.f32 %v116, %v126
    %v137 = vmax.f32 %v117, %v127
    %v138 = vmax.f32 %v118, %v128
    %v139 = vmax.f32 %v119, %v129
    %v140 = vmax.f32 %v120, %v130
    %v141 = vmax.f32 %v121, %v131
    %v142 = vmax.f32 %v122, %v132
    %143 = vst [vmem:[#allocation10] sm:$0xff] %v133
    %144 = vst [vmem:[#allocation10 + $0x8] sm:$0xff] %v134
    %145 = vst [vmem:[#allocation10 + $0x10] sm:$0xff] %v135
    %146 = vst [vmem:[#allocation10 + $0x18] sm:$0xff] %v136
    %147 = vst [vmem:[#allocation10 + $0x20] sm:$0xff] %v137
    %148 = vst [vmem:[#allocation10 + $0x28] sm:$0xff] %v138
    %149 = vst [vmem:[#allocation10 + $0x30] sm:$0xff] %v139
    %150 = vst [vmem:[#allocation10 + $0x38] sm:$0xff] %v140
    %151 = vst [vmem:[#allocation10 + $0x40] sm:$0xff] %v141
    %152 = vst [vmem:[#allocation10 + $0x48] sm:$0x7] %v142
    // Predicated region
    $region34: #{tpu_custom_call.1} parent=1 // pred_check
      _
    $region35: #{tpu_custom_call.1} parent=1 // pred_check_branch
      %154 = sbr.rel (0) target = $region37
    $region36: #{tpu_custom_call.1} parent=1 // pred_region
      %s156 = ssub.s32 1280, 1280
      %157 = vsyncadd [#allocation4], %s156
      %s158 = sshll.u32 [#allocation10], 4
      %s159 = int_to_ptr.vmem [resolvable:$true] %s158
      %164 = dma.vmem_to_hbm [thread:$0]  %s159, 1280, %s4, [#allocation4], 128, 128, 8
    $region37: #{tpu_custom_call.1} parent=1 // pred_fallthru
      _
    // Predicated region
    $region38: #{tpu_custom_call.1} parent=1 // pred_check
      _
    $region39: #{tpu_custom_call.1} parent=1 // pred_check_branch
      %166 = sbr.rel (0) target = $region41
    $region40: #{tpu_custom_call.1} parent=1 // pred_region
      %167 = dma.done [#allocation4], 1280
    $region41: #{tpu_custom_call.1} parent=1 // pred_fallthru
      _
    %168 = vsyncpa [#allocation3], 1
    %169 = vsyncpa [#allocation6], 1
    %170 = vsyncpa [#allocation9], 1
    %171 = vsyncpa [#allocation4], 1

</llo_original>
